<compile_context>
chip_gen: v6e
topology: v6e:2x2x1
jax: 0.10.0
libtpu: 0.0.40
codegen_flags: <defaults>
</compile_context>

<pallas_src>
import functools
import math

import jax
import jax.numpy as jnp
from jax.experimental import pallas as pl
from jax.experimental.pallas import tpu as pltpu

NEG_INF = -1e30
LANE = 128


def _round_up(v, m):
    return (v + m - 1) // m * m


def _lcm(a, b):
    return a * b // math.gcd(a, b)


def _pad_to(a, shape, dtype=None):
    out = jnp.pad(a, [(0, t - s) for s, t in zip(a.shape, shape)])
    if dtype is not None:
        out = out.astype(dtype)
    return out


# ---------------------------------------------------------------------------
# Kernel 1: per-node projection + attention scores (hoisted, one pass per layer)
# ---------------------------------------------------------------------------
def _project_kernel(x_ref, w_ref, q_ref, k_ref, out_ref, sc_ref, *, doutp):
    """out_cat = X @ [W0 | W1] (bf16 MXU, f32 acc); per-node q/k scores."""
    x = x_ref[...]                                             # [T, Dinp] bf16
    out_cat = jnp.dot(x, w_ref[...],
                      preferred_element_type=jnp.float32)      # [T, 2*D] f32
    out0 = out_cat[:, :doutp]
    out1 = out_cat[:, doutp:]
    q = q_ref[...]                                             # [1, D] f32
    k = k_ref[...]
    sq0 = jnp.sum(out0 * q, axis=-1, keepdims=True)            # [T, 1]
    sq1 = jnp.sum(out1 * q, axis=-1, keepdims=True)
    sk0 = jnp.sum(out0 * k, axis=-1, keepdims=True)
    sk1 = jnp.sum(out1 * k, axis=-1, keepdims=True)
    out_ref[...] = out_cat.astype(out_ref.dtype)
    sc_ref[...] = jnp.concatenate([sq0, sq1, sk0, sk1], axis=1)  # one store


def rgat_project(x_bf16, w_cat_bf16, q, k, *, tile_n):
    npad, dinp = x_bf16.shape
    dcat = w_cat_bf16.shape[-1]
    doutp = dcat // 2
    grid = (npad // tile_n,)
    kernel = functools.partial(_project_kernel, doutp=doutp)
    return pl.pallas_call(
        kernel,
        out_shape=(jax.ShapeDtypeStruct((npad, dcat), jnp.bfloat16),
                   jax.ShapeDtypeStruct((npad, 4), jnp.float32)),
        grid=grid,
        in_specs=[
            pl.BlockSpec((tile_n, dinp), lambda i: (i, 0)),
            pl.BlockSpec((dinp, dcat), lambda i: (0, 0)),
            pl.BlockSpec((1, doutp), lambda i: (0, 0)),
            pl.BlockSpec((1, doutp), lambda i: (0, 0)),
        ],
        out_specs=(
            pl.BlockSpec((tile_n, dcat), lambda i: (i, 0)),
            pl.BlockSpec((tile_n, 4), lambda i: (i, 0)),
        ),
        compiler_params=pltpu.CompilerParams(
            dimension_semantics=("parallel",),
            vmem_limit_bytes=32 * 1024 * 1024),
    )(x_bf16, w_cat_bf16, q, k)


# ---------------------------------------------------------------------------
# Kernel 2: attention + aggregation (online softmax over src tiles) [+ decoder]
# ---------------------------------------------------------------------------
def _attn_step(sc_ref, skt_ref, out_ref, adj_ref, m_sc, l_sc, acc_sc, *, doutp):
    """One (dst_tile, src_tile) online-softmax / aggregation step."""
    j = pl.program_id(1)

    @pl.when(j == 0)
    def _():
        m_sc[...] = jnp.full(m_sc.shape, NEG_INF, jnp.float32)
        l_sc[...] = jnp.zeros(l_sc.shape, jnp.float32)
        acc_sc[...] = jnp.zeros(acc_sc.shape, jnp.float32)

    sc = sc_ref[...]                       # [T, 4] f32: [sq0, sq1, sk0, sk1]
    sq0 = sc[:, 0:1]
    sq1 = sc[:, 1:2]
    skt = skt_ref[...]                     # [2, S] f32 (per-src k-scores)
    sk0 = skt[0:1, :]
    sk1 = skt[1:2, :]

    adj0 = adj_ref[0].astype(jnp.float32)  # [T, S] from int8 mask
    adj1 = adj_ref[1].astype(jnp.float32)

    def rel_logits(sq_d, sk_row, adj):
        l = sq_d + sk_row                  # VPU broadcast add [T, S]
        l = jnp.maximum(l, 0.2 * l)        # leaky_relu(0.2)
        return jnp.where(adj > 0.0, l, NEG_INF)

    lm0 = rel_logits(sq0, sk0, adj0)
    lm1 = rel_logits(sq1, sk1, adj1)

    m_blk = jnp.maximum(jnp.max(lm0, axis=1, keepdims=True),
                        jnp.max(lm1, axis=1, keepdims=True))
    m_new = jnp.maximum(m_sc[...], m_blk)                    # [T, 1]
    a = jnp.exp(m_sc[...] - m_new)                           # rescale factor
    e0 = adj0 * jnp.exp(lm0 - m_new)                         # mask multiplicatively
    e1 = adj1 * jnp.exp(lm1 - m_new)
    l_sc[...] = a * l_sc[...] + (jnp.sum(e0, axis=1, keepdims=True) +
                                 jnp.sum(e1, axis=1, keepdims=True))

    # 256-wide MXU aggregation: [e0 | e1] @ [out0 ; out1].
    out_blk = out_ref[...]                                   # [S, 2D] bf16
    out_stack = jnp.concatenate([out_blk[:, :doutp], out_blk[:, doutp:]],
                                axis=0)                      # [2S, D]
    att = jnp.concatenate([e0, e1], axis=1).astype(jnp.bfloat16)   # [T, 2S]
    acc_sc[...] = a * acc_sc[...] + jnp.dot(
        att, out_stack, preferred_element_type=jnp.float32)
    m_sc[...] = m_new


def _finalize(m_sc, l_sc, acc_sc):
    inv = 1.0 / (l_sc[...] + 1e-16)        # exact divide (exported to wrapper)
    h = acc_sc[...] * inv
    h = jnp.where(h > 0, h, jnp.exp(h) - 1.0)   # ELU
    return h, inv


def rgat_attn_kernel(sc_ref, skt_ref, out_ref, adj_ref, h_ref, st_ref,
                     m_sc, l_sc, acc_sc, *, doutp):
    _attn_step(sc_ref, skt_ref, out_ref, adj_ref, m_sc, l_sc, acc_sc, doutp=doutp)

    @pl.when(pl.program_id(1) == pl.num_programs(1) - 1)
    def _():
        h, inv = _finalize(m_sc, l_sc, acc_sc)
        h_ref[...] = h.astype(h_ref.dtype)
        st_ref[...] = jnp.concatenate([m_sc[...], inv], axis=1)  # one store


def rgat_attn_decoder_kernel(sc_ref, skt_ref, out_ref, adj_ref,
                             dw1_ref, db1_ref, dw2_ref, db2_ref,
                             h_ref, st_ref, o_ref,
                             m_sc, l_sc, acc_sc, *, doutp):
    _attn_step(sc_ref, skt_ref, out_ref, adj_ref, m_sc, l_sc, acc_sc, doutp=doutp)

    @pl.when(pl.program_id(1) == pl.num_programs(1) - 1)
    def _():
        h, inv = _finalize(m_sc, l_sc, acc_sc)
        h_ref[...] = h.astype(h_ref.dtype)
        st_ref[...] = jnp.concatenate([m_sc[...], inv], axis=1)
        # Fused 2-layer linear decoder (PCA branch: no ReLU), per dst tile.
        y = jnp.dot(h.astype(jnp.bfloat16), dw1_ref[...],
                    preferred_element_type=jnp.float32) + db1_ref[...]
        o = jnp.dot(y.astype(jnp.bfloat16), dw2_ref[...],
                    preferred_element_type=jnp.float32) + db2_ref[...]
        o_ref[...] = o.astype(o_ref.dtype)


_ATTN_SEMANTICS = pltpu.CompilerParams(
    dimension_semantics=("parallel", "arbitrary"),   # dst tiles shard (v7x 2 TCs)
    vmem_limit_bytes=32 * 1024 * 1024,
)


def rgat_attention(scores, skT, out_cat, adj, *, tile_dst, tile_src, out_dtype):
    npad = scores.shape[0]
    dcat = out_cat.shape[-1]
    doutp = dcat // 2
    grid = (npad // tile_dst, npad // tile_src)
    kernel = functools.partial(rgat_attn_kernel, doutp=doutp)
    return pl.pallas_call(
        kernel,
        out_shape=(jax.ShapeDtypeStruct((npad, doutp), out_dtype),
                   jax.ShapeDtypeStruct((npad, 2), jnp.float32)),
        grid=grid,
        in_specs=[
            pl.BlockSpec((tile_dst, 4), lambda i, j: (i, 0)),          # sq/sk dst
            pl.BlockSpec((2, tile_src), lambda i, j: (0, j)),          # sk src row
            pl.BlockSpec((tile_src, dcat), lambda i, j: (j, 0)),       # out src
            pl.BlockSpec((2, tile_dst, tile_src), lambda i, j: (0, i, j)),  # adj
        ],
        out_specs=(
            pl.BlockSpec((tile_dst, doutp), lambda i, j: (i, 0)),
            pl.BlockSpec((tile_dst, 2), lambda i, j: (i, 0)),
        ),
        scratch_shapes=[pltpu.VMEM((tile_dst, 1), jnp.float32),
                        pltpu.VMEM((tile_dst, 1), jnp.float32),
                        pltpu.VMEM((tile_dst, doutp), jnp.float32)],
        compiler_params=_ATTN_SEMANTICS,
    )(scores, skT, out_cat, adj)


def rgat_attention_decoder(scores, skT, out_cat, adj, dw1, db1, dw2, db2, *,
                           tile_dst, tile_src):
    npad = scores.shape[0]
    dcat = out_cat.shape[-1]
    doutp = dcat // 2
    hidp = dw1.shape[-1]
    odecp = dw2.shape[-1]
    grid = (npad // tile_dst, npad // tile_src)
    kernel = functools.partial(rgat_attn_decoder_kernel, doutp=doutp)
    return pl.pallas_call(
        kernel,
        out_shape=(jax.ShapeDtypeStruct((npad, doutp), jnp.float32),
                   jax.ShapeDtypeStruct((npad, 2), jnp.float32),
                   jax.ShapeDtypeStruct((npad, odecp), jnp.float32)),
        grid=grid,
        in_specs=[
            pl.BlockSpec((tile_dst, 4), lambda i, j: (i, 0)),
            pl.BlockSpec((2, tile_src), lambda i, j: (0, j)),
            pl.BlockSpec((tile_src, dcat), lambda i, j: (j, 0)),
            pl.BlockSpec((2, tile_dst, tile_src), lambda i, j: (0, i, j)),
            pl.BlockSpec((doutp, hidp), lambda i, j: (0, 0)),          # decoder W1
            pl.BlockSpec((1, hidp), lambda i, j: (0, 0)),              # decoder b1
            pl.BlockSpec((hidp, odecp), lambda i, j: (0, 0)),          # decoder W2
            pl.BlockSpec((1, odecp), lambda i, j: (0, 0)),             # decoder b2
        ],
        out_specs=(
            pl.BlockSpec((tile_dst, doutp), lambda i, j: (i, 0)),
            pl.BlockSpec((tile_dst, 2), lambda i, j: (i, 0)),
            pl.BlockSpec((tile_dst, odecp), lambda i, j: (i, 0)),
        ),
        scratch_shapes=[pltpu.VMEM((tile_dst, 1), jnp.float32),
                        pltpu.VMEM((tile_dst, 1), jnp.float32),
                        pltpu.VMEM((tile_dst, doutp), jnp.float32)],
        compiler_params=_ATTN_SEMANTICS,
    )(scores, skT, out_cat, adj, dw1, db1, dw2, db2)


# ---------------------------------------------------------------------------
# Model wrapper (mirrors RGAST.forward)
# ---------------------------------------------------------------------------
def init_params(key, in_dim, num_hidden, out_dim):
    ks = jax.random.split(key, 10)
    s = 0.1
    return {
        # conv1: RGATConv(in_dim, num_hidden, num_relations=2, heads=1)
        "w1": s * jax.random.normal(ks[0], (2, in_dim, num_hidden), jnp.float32),
        "q1": s * jax.random.normal(ks[1], (1, num_hidden), jnp.float32),
        "k1": s * jax.random.normal(ks[2], (1, num_hidden), jnp.float32),
        # conv2: RGATConv(num_hidden, out_dim, num_relations=2, heads=1)
        "w2": s * jax.random.normal(ks[3], (2, num_hidden, out_dim), jnp.float32),
        "q2": s * jax.random.normal(ks[4], (1, out_dim), jnp.float32),
        "k2": s * jax.random.normal(ks[5], (1, out_dim), jnp.float32),
        # decoder (PCA branch: two Linear layers with bias, no ReLU)
        "dw1": s * jax.random.normal(ks[6], (out_dim, num_hidden), jnp.float32),
        "db1": s * jax.random.normal(ks[7], (1, num_hidden), jnp.float32),
        "dw2": s * jax.random.normal(ks[8], (num_hidden, in_dim), jnp.float32),
        "db2": s * jax.random.normal(ks[9], (1, in_dim), jnp.float32),
    }


def _edge_alpha(scores, mstats, src, dst, edge_type):
    """Per-edge softmax coefficients from the kernels' per-node outputs."""
    sq = scores[dst, edge_type]            # scores cols 0..1: dst . q (per rel)
    sk = scores[src, 2 + edge_type]        # scores cols 2..3: src . k (per rel)
    m = mstats[dst, 0]                     # softmax running max
    inv = mstats[dst, 1]                   # 1 / denom (exact)
    l = sq + sk
    l = jnp.maximum(l, 0.2 * l)            # leaky_relu(0.2)
    return (jnp.exp(l - m) * inv)[:, None]


def rgast_forward(features, edge_index, edge_type, params, *,
                  tile_dst=128, tile_src=128):
    """Mirrors RGAST.forward -> (h2, h3, att1, att2)."""
    n, in_dim = features.shape
    num_hidden = params["w1"].shape[-1]
    out_dim = params["w2"].shape[-1]

    # Tile sizing: dst tile is the sublane dim of the int8 adjacency block
    # (needs a multiple of 32); src tile is a lane dim (multiple of 128).
    tile_dst = max(32, _round_up(min(int(tile_dst), max(n, 32)), 32))
    tile_src = max(LANE, _round_up(int(tile_src), LANE))
    npad = _round_up(n, _lcm(tile_dst, tile_src))

    dinp = _round_up(in_dim, LANE)
    hidp = _round_up(num_hidden, LANE)
    doutp = _round_up(out_dim, LANE)

    # Zero-pad to lane/tile multiples; bf16 for all MXU operands in HBM.
    x_p = _pad_to(features, (npad, dinp), jnp.bfloat16)
    w1_cat = jnp.concatenate(
        [_pad_to(params["w1"][0], (dinp, hidp)),
         _pad_to(params["w1"][1], (dinp, hidp))], axis=1).astype(jnp.bfloat16)
    q1_p = _pad_to(params["q1"], (1, hidp))
    k1_p = _pad_to(params["k1"], (1, hidp))
    w2_cat = jnp.concatenate(
        [_pad_to(params["w2"][0], (hidp, doutp)),
         _pad_to(params["w2"][1], (hidp, doutp))], axis=1).astype(jnp.bfloat16)
    q2_p = _pad_to(params["q2"], (1, doutp))
    k2_p = _pad_to(params["k2"], (1, doutp))
    dw1_p = _pad_to(params["dw1"], (doutp, hidp), jnp.bfloat16)
    db1_p = _pad_to(params["db1"], (1, hidp))
    dw2_p = _pad_to(params["dw2"], (hidp, dinp), jnp.bfloat16)
    db2_p = _pad_to(params["db2"], (1, dinp))

    src, dst = edge_index[0], edge_index[1]
    # Dense per-relation adjacency mask, int8 (half the HBM stream vs bf16).
    adj = jnp.zeros((2, npad, npad), jnp.int8).at[edge_type, dst, src].set(
        jnp.int8(1))

    # --- layer 1: hoisted projection, then online-softmax attention ----------
    out1, scores1 = rgat_project(x_p, w1_cat, q1_p, k1_p, tile_n=tile_dst)
    skT1 = jnp.transpose(scores1[:, 2:4])                 # [2, Npad]
    h1_bf16, mstats1 = rgat_attention(
        scores1, skT1, out1, adj,
        tile_dst=tile_dst, tile_src=tile_src, out_dtype=jnp.bfloat16)

    # --- layer 2 + fused decoder ---------------------------------------------
    out2, scores2 = rgat_project(h1_bf16, w2_cat, q2_p, k2_p, tile_n=tile_dst)
    skT2 = jnp.transpose(scores2[:, 2:4])
    h2_p, mstats2, h3_p = rgat_attention_decoder(
        scores2, skT2, out2, adj, dw1_p, db1_p, dw2_p, db2_p,
        tile_dst=tile_dst, tile_src=tile_src)

    h2 = h2_p[:n, :out_dim]
    h3 = h3_p[:n, :in_dim]
    alpha1 = _edge_alpha(scores1, mstats1, src, dst, edge_type)   # [E, 1]
    alpha2 = _edge_alpha(scores2, mstats2, src, dst, edge_type)
    return h2, h3, (edge_index, alpha1), (edge_index, alpha2)


if __name__ == "__main__":
    key = jax.random.PRNGKey(0)
    k_feat, k_param = jax.random.split(key)

    N, IN_DIM, NUM_HIDDEN, OUT_DIM = 200, 48, 24, 12
    features = jax.random.normal(k_feat, (N, IN_DIM), jnp.float32)

    # Deterministic edge list (no duplicates): ring (rel 0), skip-3 (rel 1),
    # self-loops (rel 0).
    ids = jnp.arange(N, dtype=jnp.int32)
    src = jnp.concatenate([(ids + 1) % N, (ids + 3) % N, ids])
    dst = jnp.concatenate([ids, ids, ids])
    edge_index = jnp.stack([src, dst], axis=0)                       # [2, 600]
    edge_type = jnp.concatenate([jnp.zeros(N, jnp.int32),
                                 jnp.ones(N, jnp.int32),
                                 jnp.zeros(N, jnp.int32)])           # [600]

    params = init_params(k_param, IN_DIM, NUM_HIDDEN, OUT_DIM)

    # tile_dst=64, tile_src=128 -> Npad=256, attention grid (4, 2):
    # exercises the parallel dst axis and the online-softmax src loop.
    h2, h3, att1, att2 = rgast_forward(features, edge_index, edge_type, params,
                                       tile_dst=64, tile_src=128)
    jax.block_until_ready((h2, h3, att1[1], att2[1]))

    assert h2.shape == (N, OUT_DIM)
    assert h3.shape == (N, IN_DIM)
    assert att1[1].shape == (edge_index.shape[1], 1)
    assert att2[1].shape == (edge_index.shape[1], 1)
    assert bool(jnp.all(jnp.isfinite(h2))) and bool(jnp.all(jnp.isfinite(h3)))
    # Softmax sanity: attention over incoming edges of each node sums to ~1.
    for alpha in (att1[1], att2[1]):
        deg_sum = jnp.zeros((N,), jnp.float32).at[dst].add(alpha[:, 0])
        assert bool(jnp.all(jnp.abs(deg_sum - 1.0) < 5e-2))
    print("KERNEL_OK")
</pallas_src>

<mosaic_0001>
module attributes {stable_mosaic.version = 11 : i64} {
  func.func @_project_kernel(%arg0: i32, %arg1: memref<64x128xbf16, #tpu.memory_space<vmem>>, %arg2: memref<128x256xbf16, #tpu.memory_space<vmem>>, %arg3: memref<1x128xf32, #tpu.memory_space<vmem>>, %arg4: memref<1x128xf32, #tpu.memory_space<vmem>>, %arg5: memref<64x256xbf16, #tpu.memory_space<vmem>>, %arg6: memref<64x4xf32, #tpu.memory_space<vmem>>) attributes {dimension_semantics = [#tpu.dimension_semantics<parallel>], iteration_bounds = array<i64: 4>, scalar_prefetch = 0 : i64, scratch_operands = 0 : i64, tpu.core_type = #tpu.core_type<tc>, window_params = [{transform_indices = @transform_0, window_bounds = array<i64: 64, 128>}, {pipeline_mode = #tpu.pipeline_mode<synchronous>, transform_indices = @transform_1, window_bounds = array<i64: 128, 256>}, {pipeline_mode = #tpu.pipeline_mode<synchronous>, transform_indices = @transform_2, window_bounds = array<i64: 1, 128>}, {pipeline_mode = #tpu.pipeline_mode<synchronous>, transform_indices = @transform_3, window_bounds = array<i64: 1, 128>}, {transform_indices = @transform_4, window_bounds = array<i64: 64, 256>}, {transform_indices = @transform_5, window_bounds = array<i64: 64, 4>}]} {
    %c0 = arith.constant 0 : index
    %c0_0 = arith.constant 0 : index
    %0 = vector.load %arg1[%c0, %c0_0] : memref<64x128xbf16, #tpu.memory_space<vmem>>, vector<64x128xbf16>
    %c0_1 = arith.constant 0 : index
    %c0_2 = arith.constant 0 : index
    %1 = vector.load %arg2[%c0_1, %c0_2] : memref<128x256xbf16, #tpu.memory_space<vmem>>, vector<128x256xbf16>
    %cst = arith.constant dense<0.000000e+00> : vector<64x256xf32>
    %2 = tpu.matmul %0, %1, %cst {dimension_numbers = #tpu.dot_dimension_numbers<[1], [0], [0], [1], [0, 0, 1, 1], [], []>} : vector<64x128xbf16>, vector<128x256xbf16>, vector<64x256xf32> -> vector<64x256xf32>
    %3 = vector.extract_strided_slice %2 {offsets = [0, 0], sizes = [64, 128], strides = [1, 1]} : vector<64x256xf32> to vector<64x128xf32>
    %4 = vector.extract_strided_slice %2 {offsets = [0, 128], sizes = [64, 128], strides = [1, 1]} : vector<64x256xf32> to vector<64x128xf32>
    %c0_3 = arith.constant 0 : index
    %c0_4 = arith.constant 0 : index
    %5 = vector.load %arg3[%c0_3, %c0_4] : memref<1x128xf32, #tpu.memory_space<vmem>>, vector<1x128xf32>
    %c0_5 = arith.constant 0 : index
    %c0_6 = arith.constant 0 : index
    %6 = vector.load %arg4[%c0_5, %c0_6] : memref<1x128xf32, #tpu.memory_space<vmem>>, vector<1x128xf32>
    %7 = vector.broadcast %5 : vector<1x128xf32> to vector<64x128xf32>
    %8 = arith.mulf %3, %7 : vector<64x128xf32>
    %cst_7 = arith.constant dense<0.000000e+00> : vector<64xf32>
    %9 = vector.multi_reduction <add>, %8, %cst_7 [1] : vector<64x128xf32> to vector<64xf32>
    %10 = vector.shape_cast %9 : vector<64xf32> to vector<64x1xf32>
    %11 = vector.broadcast %5 : vector<1x128xf32> to vector<64x128xf32>
    %12 = arith.mulf %4, %11 : vector<64x128xf32>
    %cst_8 = arith.constant dense<0.000000e+00> : vector<64xf32>
    %13 = vector.multi_reduction <add>, %12, %cst_8 [1] : vector<64x128xf32> to vector<64xf32>
    %14 = vector.shape_cast %13 : vector<64xf32> to vector<64x1xf32>
    %15 = vector.broadcast %6 : vector<1x128xf32> to vector<64x128xf32>
    %16 = arith.mulf %3, %15 : vector<64x128xf32>
    %cst_9 = arith.constant dense<0.000000e+00> : vector<64xf32>
    %17 = vector.multi_reduction <add>, %16, %cst_9 [1] : vector<64x128xf32> to vector<64xf32>
    %18 = vector.shape_cast %17 : vector<64xf32> to vector<64x1xf32>
    %19 = vector.broadcast %6 : vector<1x128xf32> to vector<64x128xf32>
    %20 = arith.mulf %4, %19 : vector<64x128xf32>
    %cst_10 = arith.constant dense<0.000000e+00> : vector<64xf32>
    %21 = vector.multi_reduction <add>, %20, %cst_10 [1] : vector<64x128xf32> to vector<64xf32>
    %22 = vector.shape_cast %21 : vector<64xf32> to vector<64x1xf32>
    %23 = arith.truncf %2 : vector<64x256xf32> to vector<64x256xbf16>
    %c0_11 = arith.constant 0 : index
    %c0_12 = arith.constant 0 : index
    %24 = vector.load %arg5[%c0_11, %c0_12] : memref<64x256xbf16, #tpu.memory_space<vmem>>, vector<64x256xbf16>
    tpu.vector_store %arg5[%c0_11, %c0_12], %23 {strides = array<i32>} : memref<64x256xbf16, #tpu.memory_space<vmem>>, vector<64x256xbf16>,
    %25 = tpu.concatenate %10, %14, %18, %22 in 1 : vector<64x1xf32>, vector<64x1xf32>, vector<64x1xf32>, vector<64x1xf32> -> vector<64x4xf32>
    %c0_13 = arith.constant 0 : index
    %c0_14 = arith.constant 0 : index
    %26 = vector.load %arg6[%c0_13, %c0_14] : memref<64x4xf32, #tpu.memory_space<vmem>>, vector<64x4xf32>
    tpu.vector_store %arg6[%c0_13, %c0_14], %25 {strides = array<i32>} : memref<64x4xf32, #tpu.memory_space<vmem>>, vector<64x4xf32>,
    return
  }
  func.func @transform_0(%arg0: i32) -> (i32, i32) {
    %c0_i32 = arith.constant 0 : i32
    %c0_i32_0 = arith.constant 0 : i32
    return %arg0, %c0_i32 : i32, i32
  }
  func.func @transform_1(%arg0: i32) -> (i32, i32) {
    %c0_i32 = arith.constant 0 : i32
    %c0_i32_0 = arith.constant 0 : i32
    %c0_i32_1 = arith.constant 0 : i32
    return %c0_i32, %c0_i32_0 : i32, i32
  }
  func.func @transform_2(%arg0: i32) -> (i32, i32) {
    %c0_i32 = arith.constant 0 : i32
    %c0_i32_0 = arith.constant 0 : i32
    %c0_i32_1 = arith.constant 0 : i32
    return %c0_i32, %c0_i32_0 : i32, i32
  }
  func.func @transform_3(%arg0: i32) -> (i32, i32) {
    %c0_i32 = arith.constant 0 : i32
    %c0_i32_0 = arith.constant 0 : i32
    %c0_i32_1 = arith.constant 0 : i32
    return %c0_i32, %c0_i32_0 : i32, i32
  }
  func.func @transform_4(%arg0: i32) -> (i32, i32) {
    %c0_i32 = arith.constant 0 : i32
    %c0_i32_0 = arith.constant 0 : i32
    return %arg0, %c0_i32 : i32, i32
  }
  func.func @transform_5(%arg0: i32) -> (i32, i32) {
    %c0_i32 = arith.constant 0 : i32
    %c0_i32_0 = arith.constant 0 : i32
    return %arg0, %c0_i32 : i32, i32
  }
}

</mosaic_0001>

<llo_original>
// kernel: tpu_custom_call.1
$region0: #{tpu_custom_call.1}
  #allocation0 [shape = 'u32[]', space=smem, size = 0x4, offset = 0x4, fixed_abs, tag = 'smem constant byte address 0x4 - core index']
  #allocation1 [shape = 'u32[144,128]{1,0:T(1,128)}', space=vmem, size = 0x12000, scoped, tag = 'internal scratch']
  %s0 = inlined_call_operand.hbm [shape: bf16[256,128], index: 0, kind: input, shape index: {}]
  %s1 = inlined_call_operand.hbm [shape: bf16[128,256], index: 1, kind: input, shape index: {}]
  %s2 = inlined_call_operand.vmem [shape: f32[1,128], index: 2, kind: input, shape index: {}]
  %s3 = inlined_call_operand.vmem [shape: f32[1,128], index: 3, kind: input, shape index: {}]
  %s4 = inlined_call_operand.hbm [shape: bf16[256,256], index: 4, kind: output, shape index: {0}]
  %s5 = inlined_call_operand.vmem [shape: f32[256,4], index: 5, kind: output, shape index: {1}]
  %6 = xla_tuple %s4, %s5
  %s7 = sld [smem:[#allocation0]]
  $region65: #{tpu_custom_call.1} parent=0
    _
  %s9 = ssub.s32 1, %s7
  %s10 = scalar_select 0, %s9, %s7
  $region1: #{tpu_custom_call.1} parent=0
    #allocation2 [shape = 'u8[32768]{0}', space=vmem, size = 0x8000, scoped, tag = 'input window, operand 0']
    #allocation3 [shape = 's32[2]{0}', space=sflag, size = 0x8, scoped, tag = 'scoped memory for tpu_custom_call.1']
    #allocation4 [shape = 's32[2]{0}', space=sflag, size = 0x8, scoped, tag = 'scoped memory for tpu_custom_call.1']
    #allocation5 [shape = 'u8[65536]{0}', space=vmem, size = 0x10000, scoped, tag = 'input window, operand 1, single buffered']
    #allocation6 [shape = 's32[1]{0}', space=sflag, size = 0x4, scoped, tag = 'scoped memory for tpu_custom_call.1']
    #allocation7 [shape = 'u8[65536]{0}', space=vmem, size = 0x10000, scoped, tag = 'output window, operand 0']
    %11 = vsyncpa [#allocation3], 0
    %s12 = scalar_lea.sflag [#allocation3], 1
    %13 = vsyncpa %s12, 0
    %14 = vsyncpa [#allocation6], 0
    %15 = vsyncpa [#allocation4], 0
    %s16 = scalar_lea.sflag [#allocation4], 1
    %17 = vsyncpa %s16, 0
    loop: start=0, step=1, limit=6
    $region2: #{tpu_custom_call.1} parent=1 // loop_pre_header
      _
    $region3: #{tpu_custom_call.1} parent=1 // loop_header
      %s19 = sphi 0, %s23
      %p20 = scmp.ge.s32.totalorder %s19, 6
      %s29 = sphi 0, %s31
      %s32 = sphi 0, %s29
      %s33 = sphi 0, %s32
      %s49 = sphi 0, %s33
      %s53 = sphi 0, %s53
      %s55 = sphi 0, %s53
      %s56 = sphi 0, %s55
      %s70 = sphi 0, %s56
      %s74 = sphi 0, %s74
      %s76 = sphi 0, %s74
      %s77 = sphi 0, %s76
      %s91 = sphi 0, %s77
      %s95 = sphi 0, %s95
      %s97 = sphi 0, %s95
      %s98 = sphi 0, %s97
      %s112 = sphi 0, %s98
      %s118 = sphi 0, %s120
      %s121 = sphi 0, %s118
      %s122 = sphi 0, %s121
      %s138 = sphi 0, %s122
      %s144 = sphi 0, %s146
      %s147 = sphi 0, %s144
      %s148 = sphi 0, %s147
      %s164 = sphi 0, %s148
    $region4: #{tpu_custom_call.1} parent=1 // loop_header_branch
      %22 = sbr.rel (%p20) target = $region8
    $region5: #{tpu_custom_call.1} parent=1 // loop_body
      %s24 = ssub.s32 %s19, 1
      %s25 = ssub.s32 %s19, 2
      %s26 = sadd.s32 %s19, 1
      %s27 = ssub.s32 %s19, %s26
      %p28 = scmp.eq.s32.totalorder %s27, 0
      %s30 = sadd.s32 %s29, 1
      %s31 = scalar_select %p28, %s29, %s30
      %p34 = pneg %p28
      %p35 = scmp.eq.s32.totalorder %s19, 3
      %p36 = por %p34, %p35
      %p37 = scmp.ne.s32.totalorder %s29, %s32
      %p38 = scmp.eq.s32.totalorder %s19, 0
      %p39 = por %p37, %p38
      %p40 = scmp.ne.s32.totalorder %s29, %s32
      %p41 = scmp.eq.s32.totalorder %s24, 3
      %p42 = por %p40, %p41
      %p43 = scmp.ne.s32.totalorder %s32, %s33
      %p44 = scmp.eq.s32.totalorder %s24, 0
      %p45 = por %p43, %p44
      %p46 = scmp.ne.s32.totalorder %s32, %s33
      %p47 = scmp.eq.s32.totalorder %s25, 3
      %p48 = por %p46, %p47
      %p50 = scmp.ne.s32.totalorder %s33, %s49
      %p51 = scmp.eq.s32.totalorder %s25, 0
      %p52 = por %p50, %p51
      %s54 = sadd.s32 %s53, 1
      %p57 = scmp.eq.s32.totalorder %s19, 3
      %p58 = scmp.ne.s32.totalorder %s53, %s55
      %p59 = scmp.eq.s32.totalorder %s19, 0
      %p60 = por %p58, %p59
      %p61 = scmp.ne.s32.totalorder %s53, %s55
      %p62 = scmp.eq.s32.totalorder %s24, 3
      %p63 = por %p61, %p62
      %p64 = scmp.ne.s32.totalorder %s55, %s56
      %p65 = scmp.eq.s32.totalorder %s24, 0
      %p66 = por %p64, %p65
      %p67 = scmp.ne.s32.totalorder %s55, %s56
      %p68 = scmp.eq.s32.totalorder %s25, 3
      %p69 = por %p67, %p68
      %p71 = scmp.ne.s32.totalorder %s56, %s70
      %p72 = scmp.eq.s32.totalorder %s25, 0
      %p73 = por %p71, %p72
      %s75 = sadd.s32 %s74, 1
      %p78 = scmp.eq.s32.totalorder %s19, 3
      %p79 = scmp.ne.s32.totalorder %s74, %s76
      %p80 = scmp.eq.s32.totalorder %s19, 0
      %p81 = por %p79, %p80
      %p82 = scmp.ne.s32.totalorder %s74, %s76
      %p83 = scmp.eq.s32.totalorder %s24, 3
      %p84 = por %p82, %p83
      %p85 = scmp.ne.s32.totalorder %s76, %s77
      %p86 = scmp.eq.s32.totalorder %s24, 0
      %p87 = por %p85, %p86
      %p88 = scmp.ne.s32.totalorder %s76, %s77
      %p89 = scmp.eq.s32.totalorder %s25, 3
      %p90 = por %p88, %p89
      %p92 = scmp.ne.s32.totalorder %s77, %s91
      %p93 = scmp.eq.s32.totalorder %s25, 0
      %p94 = por %p92, %p93
      %s96 = sadd.s32 %s95, 1
      %p99 = scmp.eq.s32.totalorder %s19, 3
      %p100 = scmp.ne.s32.totalorder %s95, %s97
      %p101 = scmp.eq.s32.totalorder %s19, 0
      %p102 = por %p100, %p101
      %p103 = scmp.ne.s32.totalorder %s95, %s97
      %p104 = scmp.eq.s32.totalorder %s24, 3
      %p105 = por %p103, %p104
      %p106 = scmp.ne.s32.totalorder %s97, %s98
      %p107 = scmp.eq.s32.totalorder %s24, 0
      %p108 = por %p106, %p107
      %p109 = scmp.ne.s32.totalorder %s97, %s98
      %p110 = scmp.eq.s32.totalorder %s25, 3
      %p111 = por %p109, %p110
      %p113 = scmp.ne.s32.totalorder %s98, %s112
      %p114 = scmp.eq.s32.totalorder %s25, 0
      %p115 = por %p113, %p114
      %s116 = ssub.s32 %s19, %s26
      %p117 = scmp.eq.s32.totalorder %s116, 0
      %s119 = sadd.s32 %s118, 1
      %s120 = scalar_select %p117, %s118, %s119
      %p123 = pneg %p117
      %p124 = scmp.eq.s32.totalorder %s19, 3
      %p125 = por %p123, %p124
      %p126 = scmp.ne.s32.totalorder %s118, %s121
      %p127 = scmp.eq.s32.totalorder %s19, 0
      %p128 = por %p126, %p127
      %p129 = scmp.ne.s32.totalorder %s118, %s121
      %p130 = scmp.eq.s32.totalorder %s24, 3
      %p131 = por %p129, %p130
      %p132 = scmp.ne.s32.totalorder %s121, %s122
      %p133 = scmp.eq.s32.totalorder %s24, 0
      %p134 = por %p132, %p133
      %p135 = scmp.ne.s32.totalorder %s121, %s122
      %p136 = scmp.eq.s32.totalorder %s25, 3
      %p137 = por %p135, %p136
      %p139 = scmp.ne.s32.totalorder %s122, %s138
      %p140 = scmp.eq.s32.totalorder %s25, 0
      %p141 = por %p139, %p140
      %s142 = ssub.s32 %s19, %s26
      %p143 = scmp.eq.s32.totalorder %s142, 0
      %s145 = sadd.s32 %s144, 1
      %s146 = scalar_select %p143, %s144, %s145
      %p149 = pneg %p143
      %p150 = scmp.eq.s32.totalorder %s19, 3
      %p151 = por %p149, %p150
      %p152 = scmp.ne.s32.totalorder %s144, %s147
      %p153 = scmp.eq.s32.totalorder %s19, 0
      %p154 = por %p152, %p153
      %p155 = scmp.ne.s32.totalorder %s144, %s147
      %p156 = scmp.eq.s32.totalorder %s24, 3
      %p157 = por %p155, %p156
      %p158 = scmp.ne.s32.totalorder %s147, %s148
      %p159 = scmp.eq.s32.totalorder %s24, 0
      %p160 = por %p158, %p159
      %p161 = scmp.ne.s32.totalorder %s147, %s148
      %p162 = scmp.eq.s32.totalorder %s25, 3
      %p163 = por %p161, %p162
      %p165 = scmp.ne.s32.totalorder %s148, %s164
      %p166 = scmp.eq.s32.totalorder %s25, 0
      %p167 = por %p165, %p166
      %p168 = scmp.le.s32.totalorder 1, %s19
      %p169 = scmp.lt.s32.totalorder %s19, 5
      %p170 = pnand %p168, %p169
      %p171 = pneg %p170
      // Predicated region
      $region9: #{tpu_custom_call.1} parent=5 // pred_check
        _
      $region10: #{tpu_custom_call.1} parent=5 // pred_check_branch
        %173 = sbr.rel (%p170) target = $region12
      $region11: #{tpu_custom_call.1} parent=5 // pred_region
        %s174 = ssub.s32 %s19, 1
        // Predicated region
        $region13: #{tpu_custom_call.1} parent=11 // pred_check
          %p175 = pneg %p66
        $region14: #{tpu_custom_call.1} parent=11 // pred_check_branch
          %177 = sbr.rel (%p175) target = $region16
        $region15: #{tpu_custom_call.1} parent=11 // pred_region
          %s179 = ssub.s32 2048, 2048
          %180 = vsyncadd [#allocation6], %s179
          %s181 = sshll.u32 [#allocation5], 4
          %s182 = int_to_ptr.vmem [resolvable:$true] %s181
          %187 = dma.hbm_to_vmem [thread:$0]  %s1, 2048, %s182, [#allocation6], 128, 128, 8
        $region16: #{tpu_custom_call.1} parent=11 // pred_fallthru
          _
        // Predicated region
        $region17: #{tpu_custom_call.1} parent=11 // pred_check
          %p188 = pneg %p87
        $region18: #{tpu_custom_call.1} parent=11 // pred_check_branch
          %190 = sbr.rel (%p188) target = $region20
        $region19: #{tpu_custom_call.1} parent=11 // pred_region
          _
        $region20: #{tpu_custom_call.1} parent=11 // pred_fallthru
          _
        // Predicated region
        $region21: #{tpu_custom_call.1} parent=11 // pred_check
          %p191 = pneg %p108
        $region22: #{tpu_custom_call.1} parent=11 // pred_check_branch
          %193 = sbr.rel (%p191) target = $region24
        $region23: #{tpu_custom_call.1} parent=11 // pred_region
          _
        $region24: #{tpu_custom_call.1} parent=11 // pred_fallthru
          _
      $region12: #{tpu_custom_call.1} parent=5 // pred_fallthru
        _
      %p194 = scmp.lt.s32.totalorder %s19, 4
      // Predicated region
      $region25: #{tpu_custom_call.1} parent=5 // pred_check
        %p195 = pneg %p194
      $region26: #{tpu_custom_call.1} parent=5 // pred_check_branch
        %197 = sbr.rel (%p195) target = $region28
      $region27: #{tpu_custom_call.1} parent=5 // pred_region
        // Predicated region
        $region29: #{tpu_custom_call.1} parent=27 // pred_check
          %p198 = pneg %p39
        $region30: #{tpu_custom_call.1} parent=27 // pred_check_branch
          %200 = sbr.rel (%p198) target = $region32
        $region31: #{tpu_custom_call.1} parent=27 // pred_region
          %s201 = sand.u32 %s29, 1
          %s202 = scalar_lea.sflag [#allocation3], %s201
          %s203 = sand.u32 %s29, 1
          %s204 = smul.addr %s203, 32
          %s205 = scalar_lea.vmem [#allocation2], %s204
          %s206 = smul.u32 8, %s19
          %s208 = ssub.s32 512, 512
          %209 = vsyncadd %s202, %s208
          %s210 = smul.addr %s206, 64
          %s211 = scalar_lea.hbm %s0, %s210
          %s212 = sshll.u32 %s205, 4
          %s213 = int_to_ptr.vmem [resolvable:$true] %s212
          %218 = dma.hbm_to_vmem [thread:$0]  %s211, 512, %s213, %s202, 64, 64, 4
        $region32: #{tpu_custom_call.1} parent=27 // pred_fallthru
          _
      $region28: #{tpu_custom_call.1} parent=5 // pred_fallthru
        _
      %p219 = scmp.le.s32.totalorder 1, %s19
      %p220 = scmp.lt.s32.totalorder %s19, 5
      %p221 = pnand %p219, %p220
      %p222 = pneg %p221
      // Predicated region
      $region33: #{tpu_custom_call.1} parent=5 // pred_check
        _
      $region34: #{tpu_custom_call.1} parent=5 // pred_check_branch
        %224 = sbr.rel (%p221) target = $region36
      $region35: #{tpu_custom_call.1} parent=5 // pred_region
        %s225 = ssub.s32 %s19, 1
        %s226 = sand.u32 %s32, 1
        %s227 = scalar_lea.sflag [#allocation3], %s226
        %s228 = sand.u32 %s32, 1
        %s229 = smul.addr %s228, 32
        %s230 = scalar_lea.vmem [#allocation2], %s229
        // Predicated region
        $region37: #{tpu_custom_call.1} parent=35 // pred_check
          %p231 = pneg %p45
        $region38: #{tpu_custom_call.1} parent=35 // pred_check_branch
          %233 = sbr.rel (%p231) target = $region40
        $region39: #{tpu_custom_call.1} parent=35 // pred_region
          %234 = dma.done %s227, 512
        $region40: #{tpu_custom_call.1} parent=35 // pred_fallthru
          _
        // Predicated region
        $region41: #{tpu_custom_call.1} parent=35 // pred_check
          %p235 = pneg %p66
        $region42: #{tpu_custom_call.1} parent=35 // pred_check_branch
          %237 = sbr.rel (%p235) target = $region44
        $region43: #{tpu_custom_call.1} parent=35 // pred_region
          %238 = dma.done [#allocation6], 2048
        $region44: #{tpu_custom_call.1} parent=35 // pred_fallthru
          _
        %s239 = sand.u32 %s32, 1
        %s240 = scalar_lea.sflag [#allocation3], %s239
        %s241 = sand.u32 %s32, 1
        %s242 = smul.addr %s241, 32
        %s243 = scalar_lea.vmem [#allocation2], %s242
        %p244 = pneg %p45
        %p245 = pneg %p42
        %p246 = pneg %p66
        %p247 = pneg %p63
        %p248 = pneg %p87
        %p249 = pneg %p84
        %p250 = pneg %p108
        %p251 = pneg %p105
        %p252 = pneg %p134
        %p253 = pneg %p131
        %s254 = sand.u32 %s121, 1
        %s255 = scalar_lea.sflag [#allocation4], %s254
        %s256 = sand.u32 %s121, 1
        %s257 = smul.addr %s256, 64
        %s258 = scalar_lea.vmem [#allocation7], %s257
        %p259 = pneg %p160
        %p260 = pneg %p157
        %s261 = smul.u32 8, %s24
        %p262 = scmp.lt.s32.totalorder %s261, 31
        %s263 = scalar_select %p262, %s261, 31
        %s264 = smul.addr %s263, 8
        %s265 = scalar_lea.vmem %s5, %s264
        %s266 = smul.u32 8, %s24
        %s267 = smul.u32 8, %s24
        %s268 = smul.u32 8, %s24
        %p269 = scmp.lt.s32.totalorder %s268, 31
        %s270 = scalar_select %p269, %s268, 31
        %s271 = smul.addr %s270, 8
        %s272 = scalar_lea.vmem %s5, %s271
        %s273 = smul.u32 8, %s24
        %v275 = vld [vmem:[%s230] sm:$0xf]
        %v276 = vld [vmem:[%s230 + $0x4] sm:$0xf]
        %v277 = vld [vmem:[%s230 + $0x8] sm:$0xf]
        %v278 = vld [vmem:[%s230 + $0xc] sm:$0xf]
        %v279 = vld [vmem:[%s230 + $0x10] sm:$0xf]
        %v280 = vld [vmem:[%s230 + $0x14] sm:$0xf]
        %v281 = vld [vmem:[%s230 + $0x18] sm:$0xf]
        %v282 = vld [vmem:[%s230 + $0x1c] sm:$0xf]
        %v283 = vld [vmem:[#allocation5] sm:$0xff]
        %v284 = vld [vmem:[#allocation5 + $0x8] sm:$0xff]
        %v285 = vld [vmem:[#allocation5 + $0x10] sm:$0xff]
        %v286 = vld [vmem:[#allocation5 + $0x18] sm:$0xff]
        %v287 = vld [vmem:[#allocation5 + $0x20] sm:$0xff]
        %v288 = vld [vmem:[#allocation5 + $0x28] sm:$0xff]
        %v289 = vld [vmem:[#allocation5 + $0x30] sm:$0xff]
        %v290 = vld [vmem:[#allocation5 + $0x38] sm:$0xff]
        %v291 = vld [vmem:[#allocation5 + $0x40] sm:$0xff]
        %v292 = vld [vmem:[#allocation5 + $0x48] sm:$0xff]
        %v293 = vld [vmem:[#allocation5 + $0x50] sm:$0xff]
        %v294 = vld [vmem:[#allocation5 + $0x58] sm:$0xff]
        %v295 = vld [vmem:[#allocation5 + $0x60] sm:$0xff]
        %v296 = vld [vmem:[#allocation5 + $0x68] sm:$0xff]
        %v297 = vld [vmem:[#allocation5 + $0x70] sm:$0xff]
        %v298 = vld [vmem:[#allocation5 + $0x78] sm:$0xff]
        %v307 = vunpack.c.l.b16 %v275
        %v308 = vunpack.c.l.b16 %v276
        %v309 = vunpack.c.l.b16 %v277
        %v310 = vunpack.c.l.b16 %v278
        %v311 = vunpack.c.l.b16 %v279
        %v312 = vunpack.c.l.b16 %v280
        %v313 = vunpack.c.l.b16 %v281
        %v314 = vunpack.c.l.b16 %v282
        %v315 = vpack.c.b16 %v308, %v307
        %v316 = vpack.c.b16 %v310, %v309
        %v317 = vpack.c.b16 %v312, %v311
        %v318 = vpack.c.b16 %v314, %v313
        %v339 = vunpack.c.l.b16 %v283
        %v340 = vunpack.c.h.b16 %v283
        %v341 = vunpack.c.l.b16 %v284
        %v342 = vunpack.c.h.b16 %v284
        %v343 = vunpack.c.l.b16 %v285
        %v344 = vunpack.c.h.b16 %v285
        %v345 = vunpack.c.l.b16 %v286
        %v346 = vunpack.c.h.b16 %v286
        %v347 = vunpack.c.l.b16 %v287
        %v348 = vunpack.c.h.b16 %v287
        %v349 = vunpack.c.l.b16 %v288
        %v350 = vunpack.c.h.b16 %v288
        %v351 = vunpack.c.l.b16 %v289
        %v352 = vunpack.c.h.b16 %v289
        %v353 = vunpack.c.l.b16 %v290
        %v354 = vunpack.c.h.b16 %v290
        %v355 = vunpack.c.l.b16 %v291
        %v356 = vunpack.c.h.b16 %v291
        %v357 = vunpack.c.l.b16 %v292
        %v358 = vunpack.c.h.b16 %v292
        %v359 = vunpack.c.l.b16 %v293
        %v360 = vunpack.c.h.b16 %v293
        %v361 = vunpack.c.l.b16 %v294
        %v362 = vunpack.c.h.b16 %v294
        %v363 = vunpack.c.l.b16 %v295
        %v364 = vunpack.c.h.b16 %v295
        %v365 = vunpack.c.l.b16 %v296
        %v366 = vunpack.c.h.b16 %v296
        %v367 = vunpack.c.l.b16 %v297
        %v368 = vunpack.c.h.b16 %v297
        %v369 = vunpack.c.l.b16 %v298
        %v370 = vunpack.c.h.b16 %v298
        %v371 = vpack.c.b16 %v341, %v339
        %v372 = vpack.c.b16 %v342, %v340
        %v373 = vpack.c.b16 %v345, %v343
        %v374 = vpack.c.b16 %v346, %v344
        %v375 = vpack.c.b16 %v349, %v347
        %v376 = vpack.c.b16 %v350, %v348
        %v377 = vpack.c.b16 %v353, %v351
        %v378 = vpack.c.b16 %v354, %v352
        %v379 = vpack.c.b16 %v357, %v355
        %v380 = vpack.c.b16 %v358, %v356
        %v381 = vpack.c.b16 %v361, %v359
        %v382 = vpack.c.b16 %v362, %v360
        %v383 = vpack.c.b16 %v365, %v363
        %v384 = vpack.c.b16 %v366, %v364
        %v385 = vpack.c.b16 %v369, %v367
        %v386 = vpack.c.b16 %v370, %v368
        %403 = vmatprep.subr.bf16.mxu0 %v386
        %404 = vmatpush1.bf16.msra.mxu0 %v385
        %405 = vmatprep.subr.bf16.mxu0 %v384
        %406 = vmatpush1.bf16.msra.mxu0 %v383
        %407 = vmatprep.subr.bf16.mxu0 %v382
        %408 = vmatpush1.bf16.msra.mxu0 %v381
        %409 = vmatprep.subr.bf16.mxu0 %v380
        %410 = vmatpush1.bf16.msra.mxu0 %v379
        %411 = vmatprep.subr.bf16.mxu0 %v378
        %412 = vmatpush1.bf16.msra.mxu0 %v377
        %413 = vmatprep.subr.bf16.mxu0 %v376
        %414 = vmatpush1.bf16.msra.mxu0 %v375
        %415 = vmatprep.subr.bf16.mxu0 %v374
        %416 = vmatpush1.bf16.msra.mxu0 %v373
        %417 = vmatprep.subr.bf16.mxu0 %v372
        %418 = vmatpush1.bf16.msra.mxu0 %v371
        %419 = vmatprep.subr.bf16.mxu0 0
        %420 = vmatpush2.bf16.msra.mxu0 0
        %421 = vmatprep.subr.bf16.mxu0 0
        %422 = vmatpush2.bf16.msra.mxu0 0
        %423 = vmatprep.subr.bf16.mxu0 0
        %424 = vmatpush2.bf16.msra.mxu0 0
        %425 = vmatprep.subr.bf16.mxu0 0
        %426 = vmatpush2.bf16.msra.mxu0 0
        %427 = vmatprep.subr.bf16.mxu0 0
        %428 = vmatpush2.bf16.msra.mxu0 0
        %429 = vmatprep.subr.bf16.mxu0 0
        %430 = vmatpush2.bf16.msra.mxu0 0
        %431 = vmatprep.subr.bf16.mxu0 0
        %432 = vmatpush2.bf16.msra.mxu0 0
        %433 = vmatprep.subr.bf16.mxu0 0
        %434 = vmatpush2.bf16.msra.mxu0 0
        %435 = vmatprep.mubr.bf16.mxu0 0
        %436 = vmatmul.mubr.bf16.gmra.mxu0 %v315
        %v437 = vpop.f32.mrf.mxu0
        %v438 = vadd.f32 0.0, %v437
        %v439 = vpop.f32.mrf.mxu0
        %v440 = vadd.f32 0.0, %v439
        %v441 = vpop.f32.mrf.mxu0
        %v442 = vadd.f32 0.0, %v441
        %v443 = vpop.f32.mrf.mxu0
        %v444 = vadd.f32 0.0, %v443
        %445 = vmatprep.mubr.bf16.mxu0 0
        %446 = vmatmul.mubr.bf16.gmra.mxu0 %v316
        %v447 = vpop.f32.mrf.mxu0
        %v448 = vadd.f32 0.0, %v447
        %v449 = vpop.f32.mrf.mxu0
        %v450 = vadd.f32 0.0, %v449
        %v451 = vpop.f32.mrf.mxu0
        %v452 = vadd.f32 0.0, %v451
        %v453 = vpop.f32.mrf.mxu0
        %v454 = vadd.f32 0.0, %v453
        %455 = vmatprep.mubr.bf16.mxu0 0
        %456 = vmatmul.mubr.bf16.gmra.mxu0 %v317
        %v457 = vpop.f32.mrf.mxu0
        %v458 = vadd.f32 0.0, %v457
        %v459 = vpop.f32.mrf.mxu0
        %v460 = vadd.f32 0.0, %v459
        %v461 = vpop.f32.mrf.mxu0
        %v462 = vadd.f32 0.0, %v461
        %v463 = vpop.f32.mrf.mxu0
        %v464 = vadd.f32 0.0, %v463
        %465 = vmatprep.mubr.bf16.mxu0 0
        %466 = vmatmul.mubr.bf16.gmra.mxu0 %v318
        %v467 = vpop.f32.mrf.mxu0
        %v468 = vadd.f32 0.0, %v467
        %v469 = vpop.f32.mrf.mxu0
        %v470 = vadd.f32 0.0, %v469
        %v471 = vpop.f32.mrf.mxu0
        %v472 = vadd.f32 0.0, %v471
        %v473 = vpop.f32.mrf.mxu0
        %v474 = vadd.f32 0.0, %v473
        %475 = vdwg.mxu0
        %v476 = vld [vmem:[%s2] sm:$0x1]
        %v477 = vld [vmem:[%s3] sm:$0x1]
        %v479 = vlaneseq
        %v480 = vshrl.u32 %v479, 7
        %v481 = vsub.s32 0, %v480
        %v482 = vrot.slane %v476, %v481
        %v484 = vmul.f32 %v438, %v482
        %v485 = vmul.f32 %v442, %v482
        %v486 = vmul.f32 %v448, %v482
        %v487 = vmul.f32 %v452, %v482
        %v488 = vmul.f32 %v458, %v482
        %v489 = vmul.f32 %v462, %v482
        %v490 = vmul.f32 %v468, %v482
        %v491 = vmul.f32 %v472, %v482
        %492 = vadd.xlane.f32.xlu0 %v484
        %v493 = vpop.xlane.xlu0 %492
        %494 = vadd.xlane.f32.xlu0 %v485
        %v495 = vpop.xlane.xlu0 %494
        %496 = vadd.xlane.f32.xlu0 %v486
        %v497 = vpop.xlane.xlu0 %496
        %498 = vadd.xlane.f32.xlu0 %v487
        %v499 = vpop.xlane.xlu0 %498
        %500 = vadd.xlane.f32.xlu0 %v488
        %v501 = vpop.xlane.xlu0 %500
        %502 = vadd.xlane.f32.xlu0 %v489
        %v503 = vpop.xlane.xlu0 %502
        %504 = vadd.xlane.f32.xlu0 %v490
        %v505 = vpop.xlane.xlu0 %504
        %506 = vadd.xlane.f32.xlu0 %v491
        %v507 = vpop.xlane.xlu0 %506
        %v508 = vmul.f32 %v440, %v482
        %v509 = vmul.f32 %v444, %v482
        %v510 = vmul.f32 %v450, %v482
        %v511 = vmul.f32 %v454, %v482
        %v512 = vmul.f32 %v460, %v482
        %v513 = vmul.f32 %v464, %v482
        %v514 = vmul.f32 %v470, %v482
        %v515 = vmul.f32 %v474, %v482
        %516 = vadd.xlane.f32.xlu0 %v508
        %v517 = vpop.xlane.xlu0 %516
        %518 = vadd.xlane.f32.xlu0 %v509
        %v519 = vpop.xlane.xlu0 %518
        %520 = vadd.xlane.f32.xlu0 %v510
        %v521 = vpop.xlane.xlu0 %520
        %522 = vadd.xlane.f32.xlu0 %v511
        %v523 = vpop.xlane.xlu0 %522
        %524 = vadd.xlane.f32.xlu0 %v512
        %v525 = vpop.xlane.xlu0 %524
        %526 = vadd.xlane.f32.xlu0 %v513
        %v527 = vpop.xlane.xlu0 %526
        %528 = vadd.xlane.f32.xlu0 %v514
        %v529 = vpop.xlane.xlu0 %528
        %530 = vadd.xlane.f32.xlu0 %v515
        %v531 = vpop.xlane.xlu0 %530
        %v533 = vlaneseq
        %v534 = vshrl.u32 %v533, 7
        %v535 = vsub.s32 0, %v534
        %v536 = vrot.slane %v477, %v535
        %v538 = vmul.f32 %v438, %v536
        %v539 = vmul.f32 %v442, %v536
        %v540 = vmul.f32 %v448, %v536
        %v541 = vmul.f32 %v452, %v536
        %v542 = vmul.f32 %v458, %v536
        %v543 = vmul.f32 %v462, %v536
        %v544 = vmul.f32 %v468, %v536
        %v545 = vmul.f32 %v472, %v536
        %546 = vadd.xlane.f32.xlu0 %v538
        %v547 = vpop.xlane.xlu0 %546
        %548 = vadd.xlane.f32.xlu0 %v539
        %v549 = vpop.xlane.xlu0 %548
        %550 = vadd.xlane.f32.xlu0 %v540
        %v551 = vpop.xlane.xlu0 %550
        %552 = vadd.xlane.f32.xlu0 %v541
        %v553 = vpop.xlane.xlu0 %552
        %554 = vadd.xlane.f32.xlu0 %v542
        %v555 = vpop.xlane.xlu0 %554
        %556 = vadd.xlane.f32.xlu0 %v543
        %v557 = vpop.xlane.xlu0 %556
        %558 = vadd.xlane.f32.xlu0 %v544
        %v559 = vpop.xlane.xlu0 %558
        %560 = vadd.xlane.f32.xlu0 %v545
        %v561 = vpop.xlane.xlu0 %560
        %v562 = vmul.f32 %v440, %v536
        %v563 = vmul.f32 %v444, %v536
        %v564 = vmul.f32 %v450, %v536
        %v565 = vmul.f32 %v454, %v536
        %v566 = vmul.f32 %v460, %v536
        %v567 = vmul.f32 %v464, %v536
        %v568 = vmul.f32 %v470, %v536
        %v569 = vmul.f32 %v474, %v536
        %570 = vadd.xlane.f32.xlu0 %v562
        %v571 = vpop.xlane.xlu0 %570
        %572 = vadd.xlane.f32.xlu0 %v563
        %v573 = vpop.xlane.xlu0 %572
        %574 = vadd.xlane.f32.xlu0 %v564
        %v575 = vpop.xlane.xlu0 %574
        %576 = vadd.xlane.f32.xlu0 %v565
        %v577 = vpop.xlane.xlu0 %576
        %578 = vadd.xlane.f32.xlu0 %v566
        %v579 = vpop.xlane.xlu0 %578
        %580 = vadd.xlane.f32.xlu0 %v567
        %v581 = vpop.xlane.xlu0 %580
        %582 = vadd.xlane.f32.xlu0 %v568
        %v583 = vpop.xlane.xlu0 %582
        %584 = vadd.xlane.f32.xlu0 %v569
        %v585 = vpop.xlane.xlu0 %584
        %v586 = vpack.c.bf16 %v442, %v438
        %v587 = vpack.c.bf16 %v444, %v440
        %v588 = vpack.c.bf16 %v452, %v448
        %v589 = vpack.c.bf16 %v454, %v450
        %v590 = vpack.c.bf16 %v462, %v458
        %v591 = vpack.c.bf16 %v464, %v460
        %v592 = vpack.c.bf16 %v472, %v468
        %v593 = vpack.c.bf16 %v474, %v470
        %v602 = vunpack.c.l.b16 %v586
        %v603 = vunpack.c.l.b16 %v587
        %v604 = vunpack.c.h.b16 %v586
        %v605 = vunpack.c.h.b16 %v587
        %v606 = vunpack.c.l.b16 %v588
        %v607 = vunpack.c.l.b16 %v589
        %v608 = vunpack.c.h.b16 %v588
        %v609 = vunpack.c.h.b16 %v589
        %v610 = vunpack.c.l.b16 %v590
        %v611 = vunpack.c.l.b16 %v591
        %v612 = vunpack.c.h.b16 %v590
        %v613 = vunpack.c.h.b16 %v591
        %v614 = vunpack.c.l.b16 %v592
        %v615 = vunpack.c.l.b16 %v593
        %v616 = vunpack.c.h.b16 %v592
        %v617 = vunpack.c.h.b16 %v593
        %v618 = vpack.c.b16 %v603, %v602
        %v619 = vpack.c.b16 %v605, %v604
        %v620 = vpack.c.b16 %v607, %v606
        %v621 = vpack.c.b16 %v609, %v608
        %v622 = vpack.c.b16 %v611, %v610
        %v623 = vpack.c.b16 %v613, %v612
        %v624 = vpack.c.b16 %v615, %v614
        %v625 = vpack.c.b16 %v617, %v616
        %634 = vst [vmem:[%s258] sm:$0xff] %v618
        %635 = vst [vmem:[%s258 + $0x8] sm:$0xff] %v619
        %636 = vst [vmem:[%s258 + $0x10] sm:$0xff] %v620
        %637 = vst [vmem:[%s258 + $0x18] sm:$0xff] %v621
        %638 = vst [vmem:[%s258 + $0x20] sm:$0xff] %v622
        %639 = vst [vmem:[%s258 + $0x28] sm:$0xff] %v623
        %640 = vst [vmem:[%s258 + $0x30] sm:$0xff] %v624
        %641 = vst [vmem:[%s258 + $0x38] sm:$0xff] %v625
        %vm642 = vcmask 7168
        %v643 = vsel %vm642, %v493, %v517
        %v644 = vsel %vm642, %v495, %v519
        %v645 = vsel %vm642, %v497, %v521
        %v646 = vsel %vm642, %v499, %v523
        %v647 = vsel %vm642, %v501, %v525
        %v648 = vsel %vm642, %v503, %v527
        %v649 = vsel %vm642, %v505, %v529
        %v650 = vsel %vm642, %v507, %v531
        %vm651 = vcmask 15360
        %v652 = vsel %vm651, %v643, %v547
        %v653 = vsel %vm651, %v644, %v549
        %v654 = vsel %vm651, %v645, %v551
        %v655 = vsel %vm651, %v646, %v553
        %v656 = vsel %vm651, %v647, %v555
        %v657 = vsel %vm651, %v648, %v557
        %v658 = vsel %vm651, %v649, %v559
        %v659 = vsel %vm651, %v650, %v561
        %vm660 = vcmask 23552
        %v661 = vsel %vm660, %v652, %v571
        %v662 = vsel %vm660, %v653, %v573
        %v663 = vsel %vm660, %v654, %v575
        %v664 = vsel %vm660, %v655, %v577
        %v665 = vsel %vm660, %v656, %v579
        %v666 = vsel %vm660, %v657, %v581
        %v667 = vsel %vm660, %v658, %v583
        %v668 = vsel %vm660, %v659, %v585
        %vm669 = vcmask 31744
        %670 = vst.msk [vmem:[%s272] sm:$0xff] %vm669, %v661
        %671 = vst.msk [vmem:[%s272 + $0x8] sm:$0xff] %vm669, %v662
        %672 = vst.msk [vmem:[%s272 + $0x10] sm:$0xff] %vm669, %v663
        %673 = vst.msk [vmem:[%s272 + $0x18] sm:$0xff] %vm669, %v664
        %674 = vst.msk [vmem:[%s272 + $0x20] sm:$0xff] %vm669, %v665
        %675 = vst.msk [vmem:[%s272 + $0x28] sm:$0xff] %vm669, %v666
        %676 = vst.msk [vmem:[%s272 + $0x30] sm:$0xff] %vm669, %v667
        %677 = vst.msk [vmem:[%s272 + $0x38] sm:$0xff] %vm669, %v668
        %s678 = sand.u32 %s121, 1
        %s679 = scalar_lea.sflag [#allocation4], %s678
        %s680 = sand.u32 %s121, 1
        %s681 = smul.addr %s680, 64
        %s682 = scalar_lea.vmem [#allocation7], %s681
        %s683 = smul.u32 8, %s24
        %p684 = scmp.lt.s32.totalorder %s683, 31
        %s685 = scalar_select %p684, %s683, 31
        %s686 = smul.addr %s685, 8
        %s687 = scalar_lea.vmem %s5, %s686
        // Predicated region
        $region45: #{tpu_custom_call.1} parent=35 // pred_check
          %p688 = pneg %p131
        $region46: #{tpu_custom_call.1} parent=35 // pred_check_branch
          %690 = sbr.rel (%p688) target = $region48
        $region47: #{tpu_custom_call.1} parent=35 // pred_region
          %s691 = smul.u32 8, %s24
          %s693 = ssub.s32 1024, 1024
          %694 = vsyncadd %s679, %s693
          %s695 = smul.addr %s691, 2
          %s696 = smul.addr %s695, 64
          %s697 = scalar_lea.hbm %s4, %s696
          %s698 = sshll.u32 %s682, 4
          %s699 = int_to_ptr.vmem [resolvable:$true] %s698
          %704 = dma.vmem_to_hbm [thread:$0]  %s699, 1024, %s697, %s679, 128, 128, 8
        $region48: #{tpu_custom_call.1} parent=35 // pred_fallthru
          _
        // Predicated region
        $region49: #{tpu_custom_call.1} parent=35 // pred_check
          %p705 = pneg %p157
        $region50: #{tpu_custom_call.1} parent=35 // pred_check_branch
          %707 = sbr.rel (%p705) target = $region52
        $region51: #{tpu_custom_call.1} parent=35 // pred_region
          %s708 = smul.u32 8, %s24
        $region52: #{tpu_custom_call.1} parent=35 // pred_fallthru
          _
      $region36: #{tpu_custom_call.1} parent=5 // pred_fallthru
        _
      %p709 = scmp.le.s32.totalorder 2, %s19
      // Predicated region
      $region53: #{tpu_custom_call.1} parent=5 // pred_check
        %p710 = pneg %p709
      $region54: #{tpu_custom_call.1} parent=5 // pred_check_branch
        %712 = sbr.rel (%p710) target = $region56
      $region55: #{tpu_custom_call.1} parent=5 // pred_region
        %s713 = ssub.s32 %s19, 2
        // Predicated region
        $region57: #{tpu_custom_call.1} parent=55 // pred_check
          %p714 = pneg %p137
        $region58: #{tpu_custom_call.1} parent=55 // pred_check_branch
          %716 = sbr.rel (%p714) target = $region60
        $region59: #{tpu_custom_call.1} parent=55 // pred_region
          %s717 = sand.u32 %s122, 1
          %s718 = scalar_lea.sflag [#allocation4], %s717
          %s719 = sand.u32 %s122, 1
          %s720 = smul.addr %s719, 64
          %s721 = scalar_lea.vmem [#allocation7], %s720
          %722 = dma.done %s718, 1024
        $region60: #{tpu_custom_call.1} parent=55 // pred_fallthru
          _
        // Predicated region
        $region61: #{tpu_custom_call.1} parent=55 // pred_check
          %p723 = pneg %p163
        $region62: #{tpu_custom_call.1} parent=55 // pred_check_branch
          %725 = sbr.rel (%p723) target = $region64
        $region63: #{tpu_custom_call.1} parent=55 // pred_region
          %s726 = smul.u32 8, %s25
          %p727 = scmp.lt.s32.totalorder %s726, 31
          %s728 = scalar_select %p727, %s726, 31
          %s729 = smul.addr %s728, 8
          %s730 = scalar_lea.vmem %s5, %s729
        $region64: #{tpu_custom_call.1} parent=55 // pred_fallthru
          _
      $region56: #{tpu_custom_call.1} parent=5 // pred_fallthru
        _
    $region6: #{tpu_custom_call.1} parent=1 // loop_footer
      %s23 = sadd.s32 1, %s19
    $region7: #{tpu_custom_call.1} parent=1 // loop_footer_branch
      %18 = sbr.rel target = $region3
    $region8: #{tpu_custom_call.1} parent=1 // loop_exit
      _
    %731 = vsyncpa [#allocation3], 1
    %s732 = scalar_lea.sflag [#allocation3], 1
    %733 = vsyncpa %s732, 1
    %734 = vsyncpa [#allocation6], 1
    %735 = vsyncpa [#allocation4], 1
    %s736 = scalar_lea.sflag [#allocation4], 1
    %737 = vsyncpa %s736, 1

</llo_original>
